<compile_context>
chip_gen: v5e
topology: v5e:2x2
jax: 0.10.0
libtpu: 0.0.40
codegen_flags: <defaults>
</compile_context>

<pallas_src>
import math
from functools import partial

import jax
import jax.numpy as jnp
from jax.experimental import pallas as pl
from jax.experimental.pallas import tpu as pltpu


# ----------------------------------------------------------------------------
# Tiled dense:  (M, K) @ (K, N) + bias  with a K grid-reduction accumulator
# ----------------------------------------------------------------------------
def _matmul_bias_kernel(a_ref, b_ref, bias_ref, o_ref, acc_ref):
    @pl.when(pl.program_id(2) == 0)
    def _():
        acc_ref[...] = jnp.zeros_like(acc_ref)

    acc_ref[...] += jnp.dot(a_ref[...], b_ref[...],
                            preferred_element_type=jnp.float32)

    @pl.when(pl.program_id(2) == pl.num_programs(2) - 1)
    def _():
        o_ref[...] = (acc_ref[...] + bias_ref[...]).astype(o_ref.dtype)


def _pick_tile(dim, target, align=128):
    """Largest tile <= target that divides dim and is `align`-aligned, else full dim."""
    if dim <= target:
        return dim
    t = (target // align) * align
    while t >= align:
        if dim % t == 0:
            return t
        t -= align
    return dim


def dense(a, w, b, *, tm_target=256, tn_target=256, tk_target=512):
    """a: (M, K) f32, w: (K, N) f32, b: (N,) f32 -> (M, N) f32, tiled Pallas matmul."""
    M, K = a.shape
    Kw, N = w.shape
    assert K == Kw
    tm = _pick_tile(M, tm_target, align=8)
    tn = _pick_tile(N, tn_target, align=128)
    tk = _pick_tile(K, tk_target, align=128)
    grid = (M // tm, N // tn, K // tk)
    return pl.pallas_call(
        _matmul_bias_kernel,
        out_shape=jax.ShapeDtypeStruct((M, N), jnp.float32),
        grid=grid,
        in_specs=[
            pl.BlockSpec((tm, tk), lambda i, j, k: (i, k)),
            pl.BlockSpec((tk, tn), lambda i, j, k: (k, j)),
            pl.BlockSpec((1, tn), lambda i, j, k: (0, j)),
        ],
        out_specs=pl.BlockSpec((tm, tn), lambda i, j, k: (i, j)),
        scratch_shapes=[pltpu.VMEM((tm, tn), jnp.float32)],
        compiler_params=pltpu.CompilerParams(
            dimension_semantics=("parallel", "parallel", "arbitrary"),
            vmem_limit_bytes=64 * 1024 * 1024,
        ),
    )(a, w, b.reshape(1, N))


# ----------------------------------------------------------------------------
# Attention: one sequence per grid step, all heads in-kernel, mask broadcast
# in-kernel (no HBM mask materialization, no head split/merge transposes).
# ----------------------------------------------------------------------------
def _attn_kernel(q_ref, k_ref, v_ref, mask_ref, o_ref, *, heads, scale):
    q = q_ref[0]                       # (S, H)
    k = k_ref[0]                       # (S, H)
    v = v_ref[0]                       # (S, H)
    add = mask_ref[0]                  # (1, S) additive key mask
    S, H = q.shape
    Dh = H // heads

    outs = []
    for h in range(heads):             # static unroll over heads
        lo, hi = h * Dh, (h + 1) * Dh
        qh = q[:, lo:hi]
        kh = k[:, lo:hi]
        vh = v[:, lo:hi]
        s = jnp.dot(qh, kh.T, preferred_element_type=jnp.float32) * scale + add
        s = s - jnp.max(s, axis=-1, keepdims=True)
        p = jnp.exp(s)
        p = p * pl.reciprocal(jnp.sum(p, axis=-1, keepdims=True), approx=True)
        outs.append(jnp.dot(p, vh, preferred_element_type=jnp.float32))
    o_ref[0] = jnp.concatenate(outs, axis=-1)   # (S, H) merged heads


def attention(q, k, v, add_mask, *, heads, scale):
    """q,k,v: (N, S, H) merged-head layout; add_mask: (N, 1, S) -> (N, S, H)."""
    N, S, H = q.shape
    kernel = partial(_attn_kernel, heads=heads, scale=scale)
    return pl.pallas_call(
        kernel,
        out_shape=jax.ShapeDtypeStruct((N, S, H), jnp.float32),
        grid=(N,),
        in_specs=[
            pl.BlockSpec((1, S, H), lambda i: (i, 0, 0)),
            pl.BlockSpec((1, S, H), lambda i: (i, 0, 0)),
            pl.BlockSpec((1, S, H), lambda i: (i, 0, 0)),
            pl.BlockSpec((1, 1, S), lambda i: (i, 0, 0)),
        ],
        out_specs=pl.BlockSpec((1, S, H), lambda i: (i, 0, 0)),
        compiler_params=pltpu.CompilerParams(
            dimension_semantics=("parallel",),
            vmem_limit_bytes=64 * 1024 * 1024,
        ),
    )(q, k, v, add_mask)


# ----------------------------------------------------------------------------
# Plain-JAX glue (embeddings, layernorm, GELU, tiny classifier + CE)
# ----------------------------------------------------------------------------
def layernorm(x, g, b, eps=1e-12):
    m = jnp.mean(x, axis=-1, keepdims=True)
    v = jnp.mean((x - m) ** 2, axis=-1, keepdims=True)
    return (x - m) / jnp.sqrt(v + eps) * g + b


def init_params(key, *, vocab, hidden, heads, inter, max_pos, type_vocab):
    def nrm(k, shape):
        return 0.02 * jax.random.normal(k, shape, jnp.float32)

    ks = iter(jax.random.split(key, 20))
    p = {
        "word_emb": nrm(next(ks), (vocab, hidden)),
        "pos_emb": nrm(next(ks), (max_pos, hidden)),
        "type_emb": nrm(next(ks), (type_vocab, hidden)),
        "emb_ln_g": jnp.ones((hidden,), jnp.float32),
        "emb_ln_b": jnp.zeros((hidden,), jnp.float32),
        "wq": nrm(next(ks), (hidden, hidden)), "bq": jnp.zeros((hidden,), jnp.float32),
        "wk": nrm(next(ks), (hidden, hidden)), "bk": jnp.zeros((hidden,), jnp.float32),
        "wv": nrm(next(ks), (hidden, hidden)), "bv": jnp.zeros((hidden,), jnp.float32),
        "wo": nrm(next(ks), (hidden, hidden)), "bo": jnp.zeros((hidden,), jnp.float32),
        "ln1_g": jnp.ones((hidden,), jnp.float32),
        "ln1_b": jnp.zeros((hidden,), jnp.float32),
        "w1": nrm(next(ks), (hidden, inter)), "b1": jnp.zeros((inter,), jnp.float32),
        "w2": nrm(next(ks), (inter, hidden)), "b2": jnp.zeros((hidden,), jnp.float32),
        "ln2_g": jnp.ones((hidden,), jnp.float32),
        "ln2_b": jnp.zeros((hidden,), jnp.float32),
        "pool_w": nrm(next(ks), (hidden, hidden)),
        "pool_b": jnp.zeros((hidden,), jnp.float32),
        # classifier = nn.Linear(hidden_size, 1)
        "cls_w": nrm(next(ks), (hidden, 1)),
        "cls_b": jnp.zeros((1,), jnp.float32),
    }
    # fused QKV weight/bias: single (H, 3H) matmul instead of three kernels
    p["wqkv"] = jnp.concatenate([p["wq"], p["wk"], p["wv"]], axis=1)
    p["bqkv"] = jnp.concatenate([p["bq"], p["bk"], p["bv"]], axis=0)
    p["heads"] = heads
    return p


def multiple_choice_forward(params, input_ids, attention_mask, labels):
    """Mirror of Multiple_choice_model_bert.forward -> (loss, reshaped_logits)."""
    B, C, S = input_ids.shape
    H = params["word_emb"].shape[1]
    heads = params["heads"]
    Dh = H // heads

    flat_ids = input_ids.reshape(-1, S)                        # (N, S)
    flat_mask = attention_mask.reshape(-1, S).astype(jnp.float32)
    N = flat_ids.shape[0]

    # --- embeddings (token_type_ids all zero, PyTorch default)
    x = (params["word_emb"][flat_ids]
         + params["pos_emb"][None, :S, :]
         + params["type_emb"][0][None, None, :])
    x = layernorm(x, params["emb_ln_g"], params["emb_ln_b"])   # (N, S, H)

    # --- one transformer encoder layer (all matmuls in Pallas)
    x2 = x.reshape(N * S, H)
    qkv = dense(x2, params["wqkv"], params["bqkv"])            # fused QKV (N*S, 3H)
    q = qkv[:, :H].reshape(N, S, H)
    k = qkv[:, H:2 * H].reshape(N, S, H)
    v = qkv[:, 2 * H:].reshape(N, S, H)

    # tiny additive key mask (N, 1, S); broadcast over heads/queries inside kernel
    add_mask = ((1.0 - flat_mask) * -1e9)[:, None, :]

    ctx = attention(q, k, v, add_mask, heads=heads, scale=1.0 / math.sqrt(Dh))
    ctx = ctx.reshape(N * S, H)                                # already head-merged

    attn_out = dense(ctx, params["wo"], params["bo"])
    x2 = layernorm(x2 + attn_out, params["ln1_g"], params["ln1_b"])

    ff = dense(x2, params["w1"], params["b1"])
    ff = jax.nn.gelu(ff, approximate=False)                    # BERT erf-GELU
    ff = dense(ff, params["w2"], params["b2"])
    x2 = layernorm(x2 + ff, params["ln2_g"], params["ln2_b"])
    hidden = x2.reshape(N, S, H)

    # --- pooler: tanh(dense(first token))  == outputs[1] of HF BERT
    pooled = jnp.tanh(dense(hidden[:, 0, :], params["pool_w"], params["pool_b"]))

    # --- dropout: identity (eval mode, deterministic)
    # --- classifier (H -> 1) + cross-entropy: tiny shapes, plain JAX / XLA fusion
    logits = pooled @ params["cls_w"] + params["cls_b"]        # (N, 1)
    reshaped_logits = logits.reshape(B, C)                     # view(-1, num_choices)
    log_probs = jax.nn.log_softmax(reshaped_logits, axis=-1)
    nll = -jnp.take_along_axis(log_probs, labels[:, None], axis=-1)[:, 0]
    loss = jnp.mean(nll)                                       # CrossEntropyLoss(mean)
    return loss, reshaped_logits


# ----------------------------------------------------------------------------
if __name__ == "__main__":
    # small config consistent with the module's forward
    BATCH, NUM_CHOICES, SEQ = 2, 4, 8
    VOCAB, HIDDEN, HEADS, INTER = 64, 32, 2, 64

    key = jax.random.PRNGKey(0)
    k_par, k_ids, k_len, k_lab = jax.random.split(key, 4)

    params = init_params(k_par, vocab=VOCAB, hidden=HIDDEN, heads=HEADS,
                         inter=INTER, max_pos=SEQ, type_vocab=2)

    input_ids = jax.random.randint(k_ids, (BATCH, NUM_CHOICES, SEQ), 0, VOCAB,
                                   dtype=jnp.int32)
    lengths = jax.random.randint(k_len, (BATCH, NUM_CHOICES), 4, SEQ + 1,
                                 dtype=jnp.int32)
    attention_mask = (jnp.arange(SEQ)[None, None, :] < lengths[:, :, None]
                      ).astype(jnp.int32)
    labels = jax.random.randint(k_lab, (BATCH,), 0, NUM_CHOICES, dtype=jnp.int32)

    loss, reshaped_logits = multiple_choice_forward(
        params, input_ids, attention_mask, labels)
    jax.block_until_ready((loss, reshaped_logits))

    assert reshaped_logits.shape == (BATCH, NUM_CHOICES)
    assert loss.shape == ()
    assert bool(jnp.isfinite(loss))
    print("KERNEL_OK")
</pallas_src>

<mosaic_0001>
module attributes {stable_mosaic.version = 11 : i64} {
  func.func @_matmul_bias_kernel(%arg0: i32, %arg1: i32, %arg2: i32, %arg3: memref<64x32xf32, #tpu.memory_space<vmem>>, %arg4: memref<32x96xf32, #tpu.memory_space<vmem>>, %arg5: memref<1x96xf32, #tpu.memory_space<vmem>>, %arg6: memref<64x96xf32, #tpu.memory_space<vmem>>, %arg7: memref<64x96xf32, #tpu.memory_space<vmem>>) attributes {dimension_semantics = [#tpu.dimension_semantics<parallel>, #tpu.dimension_semantics<parallel>, #tpu.dimension_semantics<arbitrary>], iteration_bounds = array<i64: 1, 1, 1>, scalar_prefetch = 0 : i64, scratch_operands = 1 : i64, tpu.core_type = #tpu.core_type<tc>, window_params = [{transform_indices = @transform_0, window_bounds = array<i64: 64, 32>}, {transform_indices = @transform_1, window_bounds = array<i64: 32, 96>}, {transform_indices = @transform_2, window_bounds = array<i64: 1, 96>}, {transform_indices = @transform_3, window_bounds = array<i64: 64, 96>}]} {
    %c0_i32 = arith.constant 0 : i32
    %0 = arith.cmpi eq, %arg2, %c0_i32 : i32
    %1 = arith.extui %0 : i1 to i32
    %c0_i32_0 = arith.constant 0 : i32
    %2 = arith.cmpi ne, %1, %c0_i32_0 : i32
    scf.if %2 {
      %cst_10 = arith.constant 0.000000e+00 : f32
      %12 = vector.broadcast %cst_10 : f32 to vector<64x96xf32>
      %c0_11 = arith.constant 0 : index
      %c0_12 = arith.constant 0 : index
      %13 = vector.load %arg7[%c0_11, %c0_12] : memref<64x96xf32, #tpu.memory_space<vmem>>, vector<64x96xf32>
      tpu.vector_store %arg7[%c0_11, %c0_12], %12 {strides = array<i32>} : memref<64x96xf32, #tpu.memory_space<vmem>>, vector<64x96xf32>,
    } else {
    }
    %c0 = arith.constant 0 : index
    %c0_1 = arith.constant 0 : index
    %3 = vector.load %arg7[%c0, %c0_1] : memref<64x96xf32, #tpu.memory_space<vmem>>, vector<64x96xf32>
    %c0_2 = arith.constant 0 : index
    %c0_3 = arith.constant 0 : index
    %4 = vector.load %arg3[%c0_2, %c0_3] : memref<64x32xf32, #tpu.memory_space<vmem>>, vector<64x32xf32>
    %c0_4 = arith.constant 0 : index
    %c0_5 = arith.constant 0 : index
    %5 = vector.load %arg4[%c0_4, %c0_5] : memref<32x96xf32, #tpu.memory_space<vmem>>, vector<32x96xf32>
    %cst = arith.constant dense<0.000000e+00> : vector<64x96xf32>
    %6 = tpu.matmul %4, %5, %cst {dimension_numbers = #tpu.dot_dimension_numbers<[1], [0], [0], [1], [0, 0, 1, 1], [], []>} : vector<64x32xf32>, vector<32x96xf32>, vector<64x96xf32> -> vector<64x96xf32>
    %7 = arith.addf %3, %6 : vector<64x96xf32>
    %c0_6 = arith.constant 0 : index
    %c0_7 = arith.constant 0 : index
    %8 = vector.load %arg7[%c0_6, %c0_7] : memref<64x96xf32, #tpu.memory_space<vmem>>, vector<64x96xf32>
    tpu.vector_store %arg7[%c0_6, %c0_7], %7 {strides = array<i32>} : memref<64x96xf32, #tpu.memory_space<vmem>>, vector<64x96xf32>,
    %c0_i32_8 = arith.constant 0 : i32
    %9 = arith.cmpi eq, %arg2, %c0_i32_8 : i32
    %10 = arith.extui %9 : i1 to i32
    %c0_i32_9 = arith.constant 0 : i32
    %11 = arith.cmpi ne, %10, %c0_i32_9 : i32
    scf.if %11 {
      %c0_10 = arith.constant 0 : index
      %c0_11 = arith.constant 0 : index
      %12 = vector.load %arg7[%c0_10, %c0_11] : memref<64x96xf32, #tpu.memory_space<vmem>>, vector<64x96xf32>
      %c0_12 = arith.constant 0 : index
      %c0_13 = arith.constant 0 : index
      %13 = vector.load %arg5[%c0_12, %c0_13] : memref<1x96xf32, #tpu.memory_space<vmem>>, vector<1x96xf32>
      %14 = vector.broadcast %13 : vector<1x96xf32> to vector<64x96xf32>
      %15 = arith.addf %12, %14 : vector<64x96xf32>
      %c0_14 = arith.constant 0 : index
      %c0_15 = arith.constant 0 : index
      %16 = vector.load %arg6[%c0_14, %c0_15] : memref<64x96xf32, #tpu.memory_space<vmem>>, vector<64x96xf32>
      tpu.vector_store %arg6[%c0_14, %c0_15], %15 {strides = array<i32>} : memref<64x96xf32, #tpu.memory_space<vmem>>, vector<64x96xf32>,
    } else {
    }
    return
  }
  func.func @transform_0(%arg0: i32, %arg1: i32, %arg2: i32) -> (i32, i32) {
    %c0_i32 = arith.constant 0 : i32
    return %arg0, %arg2 : i32, i32
  }
  func.func @transform_1(%arg0: i32, %arg1: i32, %arg2: i32) -> (i32, i32) {
    %c0_i32 = arith.constant 0 : i32
    return %arg2, %arg1 : i32, i32
  }
  func.func @transform_2(%arg0: i32, %arg1: i32, %arg2: i32) -> (i32, i32) {
    %c0_i32 = arith.constant 0 : i32
    %c0_i32_0 = arith.constant 0 : i32
    return %c0_i32, %arg1 : i32, i32
  }
  func.func @transform_3(%arg0: i32, %arg1: i32, %arg2: i32) -> (i32, i32) {
    %c0_i32 = arith.constant 0 : i32
    return %arg0, %arg1 : i32, i32
  }
}

</mosaic_0001>

<llo_original>
// kernel: tpu_custom_call.1
$region0: #{tpu_custom_call.1}
  #allocation0 [shape = 'u32[]', space=smem, size = 0x4, offset = 0x4, fixed_abs, tag = 'smem constant byte address 0x4 - core index']
  #allocation1 [shape = 'u32[72,128]{1,0:T(1,128)}', space=vmem, size = 0x9000, scoped, tag = 'internal scratch']
  #allocation2 [shape = 'f32[64,96]{1,0:T(8,128)}', space=vmem, size = 0x8000, scoped, tag = 'scratch operand']
  %s0 = inlined_call_operand.vmem [shape: f32[64,32], index: 0, kind: input, shape index: {}]
  %s1 = inlined_call_operand.vmem [shape: f32[32,96], index: 1, kind: input, shape index: {}]
  %s2 = inlined_call_operand.vmem [shape: f32[1,96], index: 2, kind: input, shape index: {}]
  %s3 = inlined_call_operand.hbm [shape: f32[64,96], index: 3, kind: output, shape index: {}]
  %s4 = sld [smem:[#allocation0]]
  $region30: #{tpu_custom_call.1} parent=0
    _
  %s6 = ssub.s32 1, %s4
  %s7 = scalar_select 0, %s6, %s4
  $region1: #{tpu_custom_call.1} parent=0
    #allocation3 [shape = 'u8[32768]{0}', space=vmem, size = 0x8000, scoped, tag = 'output window, operand 0, single buffered']
    #allocation4 [shape = 's32[1]{0}', space=sflag, size = 0x4, scoped, tag = 'scoped memory for tpu_custom_call.1']
    %8 = vsyncpa [#allocation4], 0
    // Predicated region
    $region2: #{tpu_custom_call.1} parent=1 // pred_check
      _
    $region3: #{tpu_custom_call.1} parent=1 // pred_check_branch
      %10 = sbr.rel (0) target = $region5
    $region4: #{tpu_custom_call.1} parent=1 // pred_region
      _
    $region5: #{tpu_custom_call.1} parent=1 // pred_fallthru
      _
    // Predicated region
    $region6: #{tpu_custom_call.1} parent=1 // pred_check
      _
    $region7: #{tpu_custom_call.1} parent=1 // pred_check_branch
      %12 = sbr.rel (0) target = $region9
    $region8: #{tpu_custom_call.1} parent=1 // pred_region
      _
    $region9: #{tpu_custom_call.1} parent=1 // pred_fallthru
      _
    // Predicated region
    $region10: #{tpu_custom_call.1} parent=1 // pred_check
      _
    $region11: #{tpu_custom_call.1} parent=1 // pred_check_branch
      %14 = sbr.rel (0) target = $region13
    $region12: #{tpu_custom_call.1} parent=1 // pred_region
      _
    $region13: #{tpu_custom_call.1} parent=1 // pred_fallthru
      _
    %p15 = scmp.eq.s32.totalorder 0, 0
    // Predicated region
    $region14: #{tpu_custom_call.1} parent=1 // pred_check
      %p16 = pneg %p15
    $region15: #{tpu_custom_call.1} parent=1 // pred_check_branch
      %18 = sbr.rel (%p16) target = $region17
    $region16: #{tpu_custom_call.1} parent=1 // pred_region
      %vm19 = vcmask 785408
      %20 = vst.msk [vmem:[#allocation2] sm:$0xff] %vm19, 0.0
      %21 = vst.msk [vmem:[#allocation2 + $0x8] sm:$0xff] %vm19, 0.0
      %22 = vst.msk [vmem:[#allocation2 + $0x10] sm:$0xff] %vm19, 0.0
      %23 = vst.msk [vmem:[#allocation2 + $0x18] sm:$0xff] %vm19, 0.0
      %24 = vst.msk [vmem:[#allocation2 + $0x20] sm:$0xff] %vm19, 0.0
      %25 = vst.msk [vmem:[#allocation2 + $0x28] sm:$0xff] %vm19, 0.0
      %26 = vst.msk [vmem:[#allocation2 + $0x30] sm:$0xff] %vm19, 0.0
      %27 = vst.msk [vmem:[#allocation2 + $0x38] sm:$0xff] %vm19, 0.0
    $region17: #{tpu_custom_call.1} parent=1 // pred_fallthru
      _
    %v28 = vld [vmem:[#allocation2] sm:$0xff]
    %v29 = vld [vmem:[#allocation2 + $0x8] sm:$0xff]
    %v30 = vld [vmem:[#allocation2 + $0x10] sm:$0xff]
    %v31 = vld [vmem:[#allocation2 + $0x18] sm:$0xff]
    %v32 = vld [vmem:[#allocation2 + $0x20] sm:$0xff]
    %v33 = vld [vmem:[#allocation2 + $0x28] sm:$0xff]
    %v34 = vld [vmem:[#allocation2 + $0x30] sm:$0xff]
    %v35 = vld [vmem:[#allocation2 + $0x38] sm:$0xff]
    %v36 = vld [vmem:[%s0] sm:$0xff]
    %v37 = vld [vmem:[%s0 + $0x8] sm:$0xff]
    %v38 = vld [vmem:[%s0 + $0x10] sm:$0xff]
    %v39 = vld [vmem:[%s0 + $0x18] sm:$0xff]
    %v40 = vld [vmem:[%s0 + $0x20] sm:$0xff]
    %v41 = vld [vmem:[%s0 + $0x28] sm:$0xff]
    %v42 = vld [vmem:[%s0 + $0x30] sm:$0xff]
    %v43 = vld [vmem:[%s0 + $0x38] sm:$0xff]
    %v44 = vld [vmem:[%s1] sm:$0xff]
    %v45 = vld [vmem:[%s1 + $0x8] sm:$0xff]
    %v46 = vld [vmem:[%s1 + $0x10] sm:$0xff]
    %v47 = vld [vmem:[%s1 + $0x18] sm:$0xff]
    %vm48 = vcmask 261120
    %v50 = vsel %vm48, %v36, 0
    %v53 = vsel %vm48, %v37, 0
    %v56 = vsel %vm48, %v38, 0
    %v59 = vsel %vm48, %v39, 0
    %v62 = vsel %vm48, %v40, 0
    %v65 = vsel %vm48, %v41, 0
    %v68 = vsel %vm48, %v42, 0
    %v71 = vsel %vm48, %v43, 0
    %73 = vmatpush.msra.mxu0 0.0
    %74 = vmatpush.msra.mxu0 0.0
    %75 = vmatpush.msra.mxu0 0.0
    %76 = vmatpush.msra.mxu0 0.0
    %77 = vmatpush.msra.mxu0 0.0
    %78 = vmatpush.msra.mxu0 0.0
    %79 = vmatpush.msra.mxu0 0.0
    %80 = vmatpush.msra.mxu0 0.0
    %81 = vmatpush.msra.mxu0 0.0
    %82 = vmatpush.msra.mxu0 0.0
    %83 = vmatpush.msra.mxu0 0.0
    %84 = vmatpush.msra.mxu0 0.0
    %85 = vmatpush.msra.mxu0 %v47
    %86 = vmatpush.msra.mxu0 %v46
    %87 = vmatpush.msra.mxu0 %v45
    %88 = vmatpush.msra.mxu0 %v44
    %89 = vmatmul.f32.gmra.mxu0 %v50
    %v90 = vpop.f32.mrf.mxu0
    %v91 = vadd.f32 0.0, %v90
    %92 = vmatmul.f32.gmra.mxu0 %v53
    %v93 = vpop.f32.mrf.mxu0
    %v94 = vadd.f32 0.0, %v93
    %95 = vmatmul.f32.gmra.mxu0 %v56
    %v96 = vpop.f32.mrf.mxu0
    %v97 = vadd.f32 0.0, %v96
    %98 = vmatmul.f32.gmra.mxu0 %v59
    %v99 = vpop.f32.mrf.mxu0
    %v100 = vadd.f32 0.0, %v99
    %101 = vmatmul.f32.gmra.mxu0 %v62
    %v102 = vpop.f32.mrf.mxu0
    %v103 = vadd.f32 0.0, %v102
    %104 = vmatmul.f32.gmra.mxu0 %v65
    %v105 = vpop.f32.mrf.mxu0
    %v106 = vadd.f32 0.0, %v105
    %107 = vmatmul.f32.gmra.mxu0 %v68
    %v108 = vpop.f32.mrf.mxu0
    %v109 = vadd.f32 0.0, %v108
    %110 = vmatmul.f32.gmra.mxu0 %v71
    %v111 = vpop.f32.mrf.mxu0
    %v112 = vadd.f32 0.0, %v111
    %113 = vdwg.mxu0
    %v114 = vadd.f32 %v28, %v91
    %v115 = vadd.f32 %v29, %v94
    %v116 = vadd.f32 %v30, %v97
    %v117 = vadd.f32 %v31, %v100
    %v118 = vadd.f32 %v32, %v103
    %v119 = vadd.f32 %v33, %v106
    %v120 = vadd.f32 %v34, %v109
    %v121 = vadd.f32 %v35, %v112
    %vm122 = vcmask 785408
    %123 = vst.msk [vmem:[#allocation2] sm:$0xff] %vm122, %v114
    %124 = vst.msk [vmem:[#allocation2 + $0x8] sm:$0xff] %vm122, %v115
    %125 = vst.msk [vmem:[#allocation2 + $0x10] sm:$0xff] %vm122, %v116
    %126 = vst.msk [vmem:[#allocation2 + $0x18] sm:$0xff] %vm122, %v117
    %127 = vst.msk [vmem:[#allocation2 + $0x20] sm:$0xff] %vm122, %v118
    %128 = vst.msk [vmem:[#allocation2 + $0x28] sm:$0xff] %vm122, %v119
    %129 = vst.msk [vmem:[#allocation2 + $0x30] sm:$0xff] %vm122, %v120
    %130 = vst.msk [vmem:[#allocation2 + $0x38] sm:$0xff] %vm122, %v121
    // Predicated region
    $region18: #{tpu_custom_call.1} parent=1 // pred_check
      %p131 = pneg %p15
    $region19: #{tpu_custom_call.1} parent=1 // pred_check_branch
      %133 = sbr.rel (%p131) target = $region21
    $region20: #{tpu_custom_call.1} parent=1 // pred_region
      %v134 = vld [vmem:[#allocation2] sm:$0xff]
      %v135 = vld [vmem:[#allocation2 + $0x8] sm:$0xff]
      %v136 = vld [vmem:[#allocation2 + $0x10] sm:$0xff]
      %v137 = vld [vmem:[#allocation2 + $0x18] sm:$0xff]
      %v138 = vld [vmem:[#allocation2 + $0x20] sm:$0xff]
      %v139 = vld [vmem:[#allocation2 + $0x28] sm:$0xff]
      %v140 = vld [vmem:[#allocation2 + $0x30] sm:$0xff]
      %v141 = vld [vmem:[#allocation2 + $0x38] sm:$0xff]
      %v142 = vld [vmem:[%s2] sm:$0x1]
      %v144 = vperm.slane %v142, 0
      %v146 = vadd.f32 %v134, %v144
      %v147 = vadd.f32 %v135, %v144
      %v148 = vadd.f32 %v136, %v144
      %v149 = vadd.f32 %v137, %v144
      %v150 = vadd.f32 %v138, %v144
      %v151 = vadd.f32 %v139, %v144
      %v152 = vadd.f32 %v140, %v144
      %v153 = vadd.f32 %v141, %v144
      %154 = vst.msk [vmem:[#allocation3] sm:$0xff] %vm122, %v146
      %155 = vst.msk [vmem:[#allocation3 + $0x8] sm:$0xff] %vm122, %v147
      %156 = vst.msk [vmem:[#allocation3 + $0x10] sm:$0xff] %vm122, %v148
      %157 = vst.msk [vmem:[#allocation3 + $0x18] sm:$0xff] %vm122, %v149
      %158 = vst.msk [vmem:[#allocation3 + $0x20] sm:$0xff] %vm122, %v150
      %159 = vst.msk [vmem:[#allocation3 + $0x28] sm:$0xff] %vm122, %v151
      %160 = vst.msk [vmem:[#allocation3 + $0x30] sm:$0xff] %vm122, %v152
      %161 = vst.msk [vmem:[#allocation3 + $0x38] sm:$0xff] %vm122, %v153
    $region21: #{tpu_custom_call.1} parent=1 // pred_fallthru
      _
    // Predicated region
    $region22: #{tpu_custom_call.1} parent=1 // pred_check
      _
    $region23: #{tpu_custom_call.1} parent=1 // pred_check_branch
      %163 = sbr.rel (0) target = $region25
    $region24: #{tpu_custom_call.1} parent=1 // pred_region
      %165 = vsyncadd [#allocation4], 0
      %s166 = sshll.u32 [#allocation3], 4
      %s167 = int_to_ptr.vmem [resolvable:$true] %s166
      %s168 = sshll.u32 %s3, 4
      %s169 = int_to_ptr.hbm [resolvable:$true] %s168
      %174 = dma.vmem_to_hbm [thread:$0]  %s167, 1024, %s169, [#allocation4], 128, 128, 8
    $region25: #{tpu_custom_call.1} parent=1 // pred_fallthru
      _
    // Predicated region
    $region26: #{tpu_custom_call.1} parent=1 // pred_check
      _
    $region27: #{tpu_custom_call.1} parent=1 // pred_check_branch
      %176 = sbr.rel (0) target = $region29
    $region28: #{tpu_custom_call.1} parent=1 // pred_region
      %178 = dma.done [#allocation4], 1024
    $region29: #{tpu_custom_call.1} parent=1 // pred_fallthru
      _
    %179 = vsyncpa [#allocation4], 1

</llo_original>
